<compile_context>
chip_gen: v7x
topology: tpu7x:2x2x1
jax: 0.10.0
libtpu: 0.0.40
codegen_flags: <defaults>
</compile_context>

<pallas_src>
import jax
import jax.numpy as jnp
from jax.experimental import pallas as pl
from jax.experimental.pallas import tpu as pltpu

INPUT_SIZE = 2
HIDDEN_SIZE = 256   # module's real hidden_size; multiple of 128 -> lane-dense
SEQ_LEN = 8


def encoder_gru_kernel(gx_ref, h0_ref, wh_ref, bhn_ref, out_ref):
    """Whole-sequence GRU recurrence in a single invocation.

    gx_ref : (T, 3H) f32   precomputed input-side gate pre-activations
                           [r|z|n], with bh_r / bh_z already folded in
    h0_ref : (1, H)  f32   initial hidden state
    wh_ref : (H, 3H) bf16  hidden-side gate weights [r|z|n]
    bhn_ref: (1, H)  f32   hidden-side bias of the n gate (kept separate: r*(.))
    out_ref: (T, H)  f32   per-step hidden states (single full-tile store)
    """
    T = gx_ref.shape[0]
    H = h0_ref.shape[-1]

    wh = wh_ref[...]                       # (H, 3H) bf16, loaded once
    bhn = bhn_ref[...]                     # (1, H)
    h = h0_ref[...]                        # (1, H) f32, carried in registers

    rows = []
    for t in range(T):                     # static, fully unrolled (T small)
        gx = gx_ref[pl.ds(t, 1), :]        # (1, 3H), static row slice
        gh = jnp.dot(h.astype(jnp.bfloat16), wh,
                     preferred_element_type=jnp.float32)          # (1, 3H)

        r = jax.nn.sigmoid(gx[:, :H] + gh[:, :H])
        z = jax.nn.sigmoid(gx[:, H:2 * H] + gh[:, H:2 * H])
        n = jnp.tanh(gx[:, 2 * H:] + r * (gh[:, 2 * H:] + bhn))
        h = (1.0 - z) * n + z * h
        rows.append(h)

    out_ref[...] = jnp.concatenate(rows, axis=0)   # one unmasked (T, H) store


def _run_gru(gx_all, h0, packed):
    """Run the whole recurrence in one pallas_call. gx_all: (T, 3H) f32."""
    T = gx_all.shape[0]
    H = h0.shape[-1]

    def full(shape):
        return pl.BlockSpec(shape, lambda i: (0, 0))

    return pl.pallas_call(
        encoder_gru_kernel,
        out_shape=jax.ShapeDtypeStruct((T, H), jnp.float32),
        grid=(1,),
        in_specs=[
            full((T, 3 * H)),      # gx_all
            full((1, H)),          # h0
            full((H, 3 * H)),      # Wh (bf16)
            full((1, H)),          # bh_n
        ],
        out_specs=full((T, H)),
        compiler_params=pltpu.CompilerParams(dimension_semantics=("arbitrary",)),
    )(gx_all.astype(jnp.float32), h0.astype(jnp.float32),
      packed["wh"], packed["bhn"])


def init_params(key, input_size=INPUT_SIZE, hidden_size=HIDDEN_SIZE):
    """Raw parameters mimicking PyTorch's uniform(-1/sqrt(fan), 1/sqrt(fan)).
    Weights stored transposed, i.e. (in_features, out_features)."""
    H = hidden_size
    ks = jax.random.split(key, 14)

    def u(k, shape, fan):
        bound = 1.0 / jnp.sqrt(jnp.float32(fan))
        return jax.random.uniform(k, shape, jnp.float32, -bound, bound)

    return dict(
        we=u(ks[0], (input_size, H), input_size),
        be=u(ks[1], (1, H), input_size),
        wir=u(ks[2], (H, H), H), wiz=u(ks[3], (H, H), H), win=u(ks[4], (H, H), H),
        bir=u(ks[5], (1, H), H), biz=u(ks[6], (1, H), H), bin=u(ks[7], (1, H), H),
        whr=u(ks[8], (H, H), H), whz=u(ks[9], (H, H), H), whn=u(ks[10], (H, H), H),
        bhr=u(ks[11], (1, H), H), bhz=u(ks[12], (1, H), H), bhn=u(ks[13], (1, H), H),
    )


def pack_params(p):
    """Offline prep:
       * fuse the three gates,
       * fold the embedding Linear into the input-side weights (exact: no
         nonlinearity between them),
       * fold bh_r / bh_z into the input-side bias (bh_n stays separate),
       * store Wh in bf16 for the in-kernel recurrence matmul."""
    H = p["whr"].shape[0]
    wi = jnp.concatenate([p["wir"], p["wiz"], p["win"]], axis=1)   # (H, 3H)
    bi = jnp.concatenate([p["bir"], p["biz"], p["bin"]], axis=1)   # (1, 3H)
    wh = jnp.concatenate([p["whr"], p["whz"], p["whn"]], axis=1)   # (H, 3H)

    wx = p["we"] @ wi                                              # (D, 3H)
    bx = p["be"] @ wi + bi                                         # (1, 3H)
    # fold the r/z hidden-side biases into the precomputed input-side bias
    bx = jnp.concatenate(
        [bx[:, :H] + p["bhr"], bx[:, H:2 * H] + p["bhz"], bx[:, 2 * H:]], axis=1)

    return dict(wx=wx, bx=bx, wh=wh.astype(jnp.bfloat16), bhn=p["bhn"])


def _precompute_gx(x_seq, packed):
    """Hoisted input-side gate pre-activations: (T, D) -> (T, 3H), outside the
    recurrence (no dependence on h)."""
    return x_seq.astype(jnp.float32) @ packed["wx"] + packed["bx"]


def encoder_rnn_forward(x, hidden, packed):
    """Exact module semantics: x (1, input_size), hidden (1, 1, H) ->
    (output, hidden), each (1, 1, H) (identical tensors for 1-layer, 1-step GRU)."""
    H = hidden.shape[-1]
    gx = _precompute_gx(x.reshape(1, -1), packed)
    out = _run_gru(gx, hidden.reshape(1, H), packed)
    h_new = out.reshape(1, 1, H)
    return h_new, h_new


def encoder_rnn_encode(x_seq, hidden0, packed):
    """Fused multi-step encoding: x_seq (T, input_size) ->
    (outputs (T, 1, H), final hidden (1, 1, H)) in one kernel launch."""
    T = x_seq.shape[0]
    H = hidden0.shape[-1]
    gx_all = _precompute_gx(x_seq, packed)
    out = _run_gru(gx_all, hidden0.reshape(1, H), packed)
    return out.reshape(T, 1, H), out[-1].reshape(1, 1, H)


def reference_step(x, h, p):
    """Pure-JAX (f32) unfused reference of one EncoderRNN.forward step."""
    emb = x @ p["we"] + p["be"]
    r = jax.nn.sigmoid(emb @ p["wir"] + p["bir"] + h @ p["whr"] + p["bhr"])
    z = jax.nn.sigmoid(emb @ p["wiz"] + p["biz"] + h @ p["whz"] + p["bhz"])
    n = jnp.tanh(emb @ p["win"] + p["bin"] + r * (h @ p["whn"] + p["bhn"]))
    return (1.0 - z) * n + z * h


if __name__ == "__main__":
    key = jax.random.PRNGKey(0)
    k_param, k_in = jax.random.split(key)

    raw = init_params(k_param)
    packed = pack_params(raw)

    # tolerance relaxed vs f32 reference because Wh is stored in bf16
    TOL = 2e-2

    # --- single-step call (exact EncoderRNN.forward semantics) ---
    x1 = jax.random.randint(k_in, (1, INPUT_SIZE), 0, 2).astype(jnp.float32)
    h0 = jnp.zeros((1, 1, HIDDEN_SIZE), jnp.float32)       # init_hidden()

    out1, hid1 = encoder_rnn_forward(x1, h0, packed)
    out1 = jax.block_until_ready(out1)
    hid1 = jax.block_until_ready(hid1)

    ref1 = reference_step(x1, h0.reshape(1, HIDDEN_SIZE), raw).reshape(1, 1, HIDDEN_SIZE)
    assert out1.shape == (1, 1, HIDDEN_SIZE) and hid1.shape == (1, 1, HIDDEN_SIZE)
    assert jnp.allclose(out1, ref1, atol=TOL), "single-step output mismatch vs reference"
    assert jnp.allclose(hid1, ref1, atol=TOL), "single-step hidden mismatch vs reference"

    # --- fused sequence call (T steps, one launch, h carried in registers) ---
    x_seq = jax.random.randint(jax.random.PRNGKey(1), (SEQ_LEN, INPUT_SIZE), 0, 2
                               ).astype(jnp.float32)
    outs, hid = encoder_rnn_encode(x_seq, h0, packed)
    outs = jax.block_until_ready(outs)
    hid = jax.block_until_ready(hid)

    h_ref = h0.reshape(1, HIDDEN_SIZE)
    ref_rows = []
    for t in range(SEQ_LEN):
        h_ref = reference_step(x_seq[t:t + 1], h_ref, raw)
        ref_rows.append(h_ref)
    ref_seq = jnp.concatenate(ref_rows, axis=0).reshape(SEQ_LEN, 1, HIDDEN_SIZE)

    assert outs.shape == (SEQ_LEN, 1, HIDDEN_SIZE)
    assert jnp.allclose(outs, ref_seq, atol=TOL), "sequence outputs mismatch vs reference"
    assert jnp.allclose(hid, ref_seq[-1].reshape(1, 1, HIDDEN_SIZE), atol=TOL), \
        "final hidden mismatch vs reference"

    print("KERNEL_OK")
</pallas_src>

<mosaic_0001>
module attributes {stable_mosaic.version = 11 : i64} {
  func.func @encoder_gru_kernel(%arg0: i32, %arg1: memref<1x768xf32, #tpu.memory_space<vmem>>, %arg2: memref<1x256xf32, #tpu.memory_space<vmem>>, %arg3: memref<256x768xbf16, #tpu.memory_space<vmem>>, %arg4: memref<1x256xf32, #tpu.memory_space<vmem>>, %arg5: memref<1x256xf32, #tpu.memory_space<vmem>>) attributes {dimension_semantics = [#tpu.dimension_semantics<arbitrary>], iteration_bounds = array<i64: 1>, scalar_prefetch = 0 : i64, scratch_operands = 0 : i64, tpu.core_type = #tpu.core_type<tc>, window_params = [{pipeline_mode = #tpu.pipeline_mode<synchronous>, transform_indices = @transform_0, window_bounds = array<i64: 1, 768>}, {pipeline_mode = #tpu.pipeline_mode<synchronous>, transform_indices = @transform_1, window_bounds = array<i64: 1, 256>}, {pipeline_mode = #tpu.pipeline_mode<synchronous>, transform_indices = @transform_2, window_bounds = array<i64: 256, 768>}, {pipeline_mode = #tpu.pipeline_mode<synchronous>, transform_indices = @transform_3, window_bounds = array<i64: 1, 256>}, {pipeline_mode = #tpu.pipeline_mode<synchronous>, transform_indices = @transform_4, window_bounds = array<i64: 1, 256>}]} {
    %c0 = arith.constant 0 : index
    %c0_0 = arith.constant 0 : index
    %0 = vector.load %arg3[%c0, %c0_0] : memref<256x768xbf16, #tpu.memory_space<vmem>>, vector<256x768xbf16>
    %c0_1 = arith.constant 0 : index
    %c0_2 = arith.constant 0 : index
    %1 = vector.load %arg4[%c0_1, %c0_2] : memref<1x256xf32, #tpu.memory_space<vmem>>, vector<1x256xf32>
    %c0_3 = arith.constant 0 : index
    %c0_4 = arith.constant 0 : index
    %2 = vector.load %arg2[%c0_3, %c0_4] : memref<1x256xf32, #tpu.memory_space<vmem>>, vector<1x256xf32>
    %c0_5 = arith.constant 0 : index
    %c0_6 = arith.constant 0 : index
    %3 = vector.load %arg1[%c0_5, %c0_6] : memref<1x768xf32, #tpu.memory_space<vmem>>, vector<1x768xf32>
    %4 = arith.truncf %2 : vector<1x256xf32> to vector<1x256xbf16>
    %cst = arith.constant dense<0.000000e+00> : vector<1x768xf32>
    %5 = tpu.matmul %4, %0, %cst {dimension_numbers = #tpu.dot_dimension_numbers<[1], [0], [0], [1], [0, 0, 1, 1], [], []>} : vector<1x256xbf16>, vector<256x768xbf16>, vector<1x768xf32> -> vector<1x768xf32>
    %6 = vector.extract_strided_slice %3 {offsets = [0, 0], sizes = [1, 256], strides = [1, 1]} : vector<1x768xf32> to vector<1x256xf32>
    %7 = vector.extract_strided_slice %5 {offsets = [0, 0], sizes = [1, 256], strides = [1, 1]} : vector<1x768xf32> to vector<1x256xf32>
    %8 = arith.addf %6, %7 : vector<1x256xf32>
    %9 = arith.negf %8 : vector<1x256xf32>
    %10 = math.exp %9 : vector<1x256xf32>
    %cst_7 = arith.constant 1.000000e+00 : f32
    %11 = vector.broadcast %cst_7 : f32 to vector<1x256xf32>
    %12 = arith.addf %11, %10 : vector<1x256xf32>
    %13 = arith.divf %11, %12 : vector<1x256xf32>
    %14 = vector.extract_strided_slice %3 {offsets = [0, 256], sizes = [1, 256], strides = [1, 1]} : vector<1x768xf32> to vector<1x256xf32>
    %15 = vector.extract_strided_slice %5 {offsets = [0, 256], sizes = [1, 256], strides = [1, 1]} : vector<1x768xf32> to vector<1x256xf32>
    %16 = arith.addf %14, %15 : vector<1x256xf32>
    %17 = arith.negf %16 : vector<1x256xf32>
    %18 = math.exp %17 : vector<1x256xf32>
    %cst_8 = arith.constant 1.000000e+00 : f32
    %19 = vector.broadcast %cst_8 : f32 to vector<1x256xf32>
    %20 = arith.addf %19, %18 : vector<1x256xf32>
    %21 = arith.divf %19, %20 : vector<1x256xf32>
    %22 = vector.extract_strided_slice %3 {offsets = [0, 512], sizes = [1, 256], strides = [1, 1]} : vector<1x768xf32> to vector<1x256xf32>
    %23 = vector.extract_strided_slice %5 {offsets = [0, 512], sizes = [1, 256], strides = [1, 1]} : vector<1x768xf32> to vector<1x256xf32>
    %24 = arith.addf %23, %1 : vector<1x256xf32>
    %25 = arith.mulf %13, %24 : vector<1x256xf32>
    %26 = arith.addf %22, %25 : vector<1x256xf32>
    %27 = math.tanh %26 : vector<1x256xf32>
    %cst_9 = arith.constant 1.000000e+00 : f32
    %28 = vector.broadcast %cst_9 : f32 to vector<1x256xf32>
    %29 = arith.subf %28, %21 : vector<1x256xf32>
    %30 = arith.mulf %29, %27 : vector<1x256xf32>
    %31 = arith.mulf %21, %2 : vector<1x256xf32>
    %32 = arith.addf %30, %31 : vector<1x256xf32>
    %c0_10 = arith.constant 0 : index
    %c0_11 = arith.constant 0 : index
    %33 = vector.load %arg5[%c0_10, %c0_11] : memref<1x256xf32, #tpu.memory_space<vmem>>, vector<1x256xf32>
    tpu.vector_store %arg5[%c0_10, %c0_11], %32 {strides = array<i32>} : memref<1x256xf32, #tpu.memory_space<vmem>>, vector<1x256xf32>,
    return
  }
  func.func @transform_0(%arg0: i32) -> (i32, i32) {
    %c0_i32 = arith.constant 0 : i32
    %c0_i32_0 = arith.constant 0 : i32
    %c0_i32_1 = arith.constant 0 : i32
    return %c0_i32, %c0_i32_0 : i32, i32
  }
  func.func @transform_1(%arg0: i32) -> (i32, i32) {
    %c0_i32 = arith.constant 0 : i32
    %c0_i32_0 = arith.constant 0 : i32
    %c0_i32_1 = arith.constant 0 : i32
    return %c0_i32, %c0_i32_0 : i32, i32
  }
  func.func @transform_2(%arg0: i32) -> (i32, i32) {
    %c0_i32 = arith.constant 0 : i32
    %c0_i32_0 = arith.constant 0 : i32
    %c0_i32_1 = arith.constant 0 : i32
    return %c0_i32, %c0_i32_0 : i32, i32
  }
  func.func @transform_3(%arg0: i32) -> (i32, i32) {
    %c0_i32 = arith.constant 0 : i32
    %c0_i32_0 = arith.constant 0 : i32
    %c0_i32_1 = arith.constant 0 : i32
    return %c0_i32, %c0_i32_0 : i32, i32
  }
  func.func @transform_4(%arg0: i32) -> (i32, i32) {
    %c0_i32 = arith.constant 0 : i32
    %c0_i32_0 = arith.constant 0 : i32
    %c0_i32_1 = arith.constant 0 : i32
    return %c0_i32, %c0_i32_0 : i32, i32
  }
}

</mosaic_0001>

<llo_original>
// kernel: tpu_custom_call.1
$region0: #{tpu_custom_call.1}
  #allocation0 [shape = 'u32[]', space=smem, size = 0x4, offset = 0x4, fixed_abs, tag = 'smem constant byte address 0x4 - core index']
  #allocation1 [shape = 'u32[144,128]{1,0:T(1,128)}', space=vmem, size = 0x12000, scoped, tag = 'internal scratch']
  %s0 = inlined_call_operand.hbm [shape: f32[1,768], index: 0, kind: input, shape index: {}]
  %s1 = inlined_call_operand.vmem [shape: f32[1,256], index: 1, kind: input, shape index: {}]
  %s2 = inlined_call_operand.hbm [shape: bf16[256,768], index: 2, kind: input, shape index: {}]
  %s3 = inlined_call_operand.vmem [shape: f32[1,256], index: 3, kind: input, shape index: {}]
  %s4 = inlined_call_operand.hbm [shape: f32[1,256], index: 4, kind: output, shape index: {}]
  %s5 = sld [smem:[#allocation0]]
  $region34: #{tpu_custom_call.1} parent=0
    _
  %s7 = ssub.s32 1, %s5
  %s8 = scalar_select 0, %s7, %s5
  $region1: #{tpu_custom_call.1} parent=0
    #allocation2 [shape = 'u8[3072]{0}', space=vmem, size = 0xc00, scoped, tag = 'input window, operand 0, single buffered']
    #allocation3 [shape = 's32[1]{0}', space=sflag, size = 0x4, scoped, tag = 'scoped memory for tpu_custom_call.1']
    #allocation4 [shape = 's32[1]{0}', space=sflag, size = 0x4, scoped, tag = 'scoped memory for tpu_custom_call.1']
    #allocation5 [shape = 'u8[393216]{0}', space=vmem, size = 0x60000, scoped, tag = 'input window, operand 2, single buffered']
    #allocation6 [shape = 's32[1]{0}', space=sflag, size = 0x4, scoped, tag = 'scoped memory for tpu_custom_call.1']
    #allocation7 [shape = 'u8[1024]{0}', space=vmem, size = 0x400, scoped, tag = 'output window, operand 0, single buffered']
    %9 = vsyncpa [#allocation3], 0
    %10 = vsyncpa [#allocation6], 0
    %11 = vsyncpa [#allocation4], 0
    // Predicated region
    $region2: #{tpu_custom_call.1} parent=1 // pred_check
      _
    $region3: #{tpu_custom_call.1} parent=1 // pred_check_branch
      %13 = sbr.rel (0) target = $region5
    $region4: #{tpu_custom_call.1} parent=1 // pred_region
      %s15 = ssub.s32 96, 96
      %16 = vsyncadd [#allocation3], %s15
      %s18 = sshll.u32 [#allocation2], 4
      %s19 = int_to_ptr.vmem [resolvable:$true] %s18
      %21 = dma.hbm_to_vmem [thread:$0]  %s0, 96, %s19, [#allocation3]
    $region5: #{tpu_custom_call.1} parent=1 // pred_fallthru
      _
    // Predicated region
    $region6: #{tpu_custom_call.1} parent=1 // pred_check
      _
    $region7: #{tpu_custom_call.1} parent=1 // pred_check_branch
      %23 = sbr.rel (0) target = $region9
    $region8: #{tpu_custom_call.1} parent=1 // pred_region
      _
    $region9: #{tpu_custom_call.1} parent=1 // pred_fallthru
      _
    // Predicated region
    $region10: #{tpu_custom_call.1} parent=1 // pred_check
      _
    $region11: #{tpu_custom_call.1} parent=1 // pred_check_branch
      %25 = sbr.rel (0) target = $region13
    $region12: #{tpu_custom_call.1} parent=1 // pred_region
      %s27 = ssub.s32 12288, 12288
      %28 = vsyncadd [#allocation6], %s27
      %s29 = sshll.u32 [#allocation5], 4
      %s30 = int_to_ptr.vmem [resolvable:$true] %s29
      %35 = dma.hbm_to_vmem [thread:$0]  %s2, 12288, %s30, [#allocation6], 384, 384, 24
    $region13: #{tpu_custom_call.1} parent=1 // pred_fallthru
      _
    // Predicated region
    $region14: #{tpu_custom_call.1} parent=1 // pred_check
      _
    $region15: #{tpu_custom_call.1} parent=1 // pred_check_branch
      %37 = sbr.rel (0) target = $region17
    $region16: #{tpu_custom_call.1} parent=1 // pred_region
      _
    $region17: #{tpu_custom_call.1} parent=1 // pred_fallthru
      _
    // Predicated region
    $region18: #{tpu_custom_call.1} parent=1 // pred_check
      _
    $region19: #{tpu_custom_call.1} parent=1 // pred_check_branch
      %39 = sbr.rel (0) target = $region21
    $region20: #{tpu_custom_call.1} parent=1 // pred_region
      %40 = dma.done [#allocation3], 96
    $region21: #{tpu_custom_call.1} parent=1 // pred_fallthru
      _
    // Predicated region
    $region22: #{tpu_custom_call.1} parent=1 // pred_check
      _
    $region23: #{tpu_custom_call.1} parent=1 // pred_check_branch
      %42 = sbr.rel (0) target = $region25
    $region24: #{tpu_custom_call.1} parent=1 // pred_region
      %43 = dma.done [#allocation6], 12288
    $region25: #{tpu_custom_call.1} parent=1 // pred_fallthru
      _
    %v44 = vld [vmem:[#allocation5] sm:$0xff]
    %v45 = vld [vmem:[#allocation5 + $0x8] sm:$0xff]
    %v46 = vld [vmem:[#allocation5 + $0x10] sm:$0xff]
    %v47 = vld [vmem:[#allocation5 + $0x18] sm:$0xff]
    %v48 = vld [vmem:[#allocation5 + $0x20] sm:$0xff]
    %v49 = vld [vmem:[#allocation5 + $0x28] sm:$0xff]
    %v50 = vld [vmem:[#allocation5 + $0x30] sm:$0xff]
    %v51 = vld [vmem:[#allocation5 + $0x38] sm:$0xff]
    %v52 = vld [vmem:[#allocation5 + $0x40] sm:$0xff]
    %v53 = vld [vmem:[#allocation5 + $0x48] sm:$0xff]
    %v54 = vld [vmem:[#allocation5 + $0x50] sm:$0xff]
    %v55 = vld [vmem:[#allocation5 + $0x58] sm:$0xff]
    %v56 = vld [vmem:[#allocation5 + $0x60] sm:$0xff]
    %v57 = vld [vmem:[#allocation5 + $0x68] sm:$0xff]
    %v58 = vld [vmem:[#allocation5 + $0x70] sm:$0xff]
    %v59 = vld [vmem:[#allocation5 + $0x78] sm:$0xff]
    %v60 = vld [vmem:[#allocation5 + $0x80] sm:$0xff]
    %v61 = vld [vmem:[#allocation5 + $0x88] sm:$0xff]
    %v62 = vld [vmem:[#allocation5 + $0x90] sm:$0xff]
    %v63 = vld [vmem:[#allocation5 + $0x98] sm:$0xff]
    %v64 = vld [vmem:[#allocation5 + $0xa0] sm:$0xff]
    %v65 = vld [vmem:[#allocation5 + $0xa8] sm:$0xff]
    %v66 = vld [vmem:[#allocation5 + $0xb0] sm:$0xff]
    %v67 = vld [vmem:[#allocation5 + $0xb8] sm:$0xff]
    %v68 = vld [vmem:[#allocation5 + $0xc0] sm:$0xff]
    %v69 = vld [vmem:[#allocation5 + $0xc8] sm:$0xff]
    %v70 = vld [vmem:[#allocation5 + $0xd0] sm:$0xff]
    %v71 = vld [vmem:[#allocation5 + $0xd8] sm:$0xff]
    %v72 = vld [vmem:[#allocation5 + $0xe0] sm:$0xff]
    %v73 = vld [vmem:[#allocation5 + $0xe8] sm:$0xff]
    %v74 = vld [vmem:[#allocation5 + $0xf0] sm:$0xff]
    %v75 = vld [vmem:[#allocation5 + $0xf8] sm:$0xff]
    %v76 = vld [vmem:[#allocation5 + $0x100] sm:$0xff]
    %v77 = vld [vmem:[#allocation5 + $0x108] sm:$0xff]
    %v78 = vld [vmem:[#allocation5 + $0x110] sm:$0xff]
    %v79 = vld [vmem:[#allocation5 + $0x118] sm:$0xff]
    %v80 = vld [vmem:[#allocation5 + $0x120] sm:$0xff]
    %v81 = vld [vmem:[#allocation5 + $0x128] sm:$0xff]
    %v82 = vld [vmem:[#allocation5 + $0x130] sm:$0xff]
    %v83 = vld [vmem:[#allocation5 + $0x138] sm:$0xff]
    %v84 = vld [vmem:[#allocation5 + $0x140] sm:$0xff]
    %v85 = vld [vmem:[#allocation5 + $0x148] sm:$0xff]
    %v86 = vld [vmem:[#allocation5 + $0x150] sm:$0xff]
    %v87 = vld [vmem:[#allocation5 + $0x158] sm:$0xff]
    %v88 = vld [vmem:[#allocation5 + $0x160] sm:$0xff]
    %v89 = vld [vmem:[#allocation5 + $0x168] sm:$0xff]
    %v90 = vld [vmem:[#allocation5 + $0x170] sm:$0xff]
    %v91 = vld [vmem:[#allocation5 + $0x178] sm:$0xff]
    %v92 = vld [vmem:[#allocation5 + $0x180] sm:$0xff]
    %v93 = vld [vmem:[#allocation5 + $0x188] sm:$0xff]
    %v94 = vld [vmem:[#allocation5 + $0x190] sm:$0xff]
    %v95 = vld [vmem:[#allocation5 + $0x198] sm:$0xff]
    %v96 = vld [vmem:[#allocation5 + $0x1a0] sm:$0xff]
    %v97 = vld [vmem:[#allocation5 + $0x1a8] sm:$0xff]
    %v98 = vld [vmem:[#allocation5 + $0x1b0] sm:$0xff]
    %v99 = vld [vmem:[#allocation5 + $0x1b8] sm:$0xff]
    %v100 = vld [vmem:[#allocation5 + $0x1c0] sm:$0xff]
    %v101 = vld [vmem:[#allocation5 + $0x1c8] sm:$0xff]
    %v102 = vld [vmem:[#allocation5 + $0x1d0] sm:$0xff]
    %v103 = vld [vmem:[#allocation5 + $0x1d8] sm:$0xff]
    %v104 = vld [vmem:[#allocation5 + $0x1e0] sm:$0xff]
    %v105 = vld [vmem:[#allocation5 + $0x1e8] sm:$0xff]
    %v106 = vld [vmem:[#allocation5 + $0x1f0] sm:$0xff]
    %v107 = vld [vmem:[#allocation5 + $0x1f8] sm:$0xff]
    %v108 = vld [vmem:[#allocation5 + $0x200] sm:$0xff]
    %v109 = vld [vmem:[#allocation5 + $0x208] sm:$0xff]
    %v110 = vld [vmem:[#allocation5 + $0x210] sm:$0xff]
    %v111 = vld [vmem:[#allocation5 + $0x218] sm:$0xff]
    %v112 = vld [vmem:[#allocation5 + $0x220] sm:$0xff]
    %v113 = vld [vmem:[#allocation5 + $0x228] sm:$0xff]
    %v114 = vld [vmem:[#allocation5 + $0x230] sm:$0xff]
    %v115 = vld [vmem:[#allocation5 + $0x238] sm:$0xff]
    %v116 = vld [vmem:[#allocation5 + $0x240] sm:$0xff]
    %v117 = vld [vmem:[#allocation5 + $0x248] sm:$0xff]
    %v118 = vld [vmem:[#allocation5 + $0x250] sm:$0xff]
    %v119 = vld [vmem:[#allocation5 + $0x258] sm:$0xff]
    %v120 = vld [vmem:[#allocation5 + $0x260] sm:$0xff]
    %v121 = vld [vmem:[#allocation5 + $0x268] sm:$0xff]
    %v122 = vld [vmem:[#allocation5 + $0x270] sm:$0xff]
    %v123 = vld [vmem:[#allocation5 + $0x278] sm:$0xff]
    %v124 = vld [vmem:[#allocation5 + $0x280] sm:$0xff]
    %v125 = vld [vmem:[#allocation5 + $0x288] sm:$0xff]
    %v126 = vld [vmem:[#allocation5 + $0x290] sm:$0xff]
    %v127 = vld [vmem:[#allocation5 + $0x298] sm:$0xff]
    %v128 = vld [vmem:[#allocation5 + $0x2a0] sm:$0xff]
    %v129 = vld [vmem:[#allocation5 + $0x2a8] sm:$0xff]
    %v130 = vld [vmem:[#allocation5 + $0x2b0] sm:$0xff]
    %v131 = vld [vmem:[#allocation5 + $0x2b8] sm:$0xff]
    %v132 = vld [vmem:[#allocation5 + $0x2c0] sm:$0xff]
    %v133 = vld [vmem:[#allocation5 + $0x2c8] sm:$0xff]
    %v134 = vld [vmem:[#allocation5 + $0x2d0] sm:$0xff]
    %v135 = vld [vmem:[#allocation5 + $0x2d8] sm:$0xff]
    %v136 = vld [vmem:[#allocation5 + $0x2e0] sm:$0xff]
    %v137 = vld [vmem:[#allocation5 + $0x2e8] sm:$0xff]
    %v138 = vld [vmem:[#allocation5 + $0x2f0] sm:$0xff]
    %v139 = vld [vmem:[#allocation5 + $0x2f8] sm:$0xff]
    %v140 = vld [vmem:[%s3] sm:$0x3]
    %v141 = vld [vmem:[%s1] sm:$0x3]
    %v142 = vld [vmem:[#allocation2] sm:$0x3f]
    %v144 = vlaneseq
    %v145 = vshrl.u32 %v144, 7
    %v146 = vsub.s32 0, %v145
    %v147 = vrot.slane %v141, %v146
    %v148 = vlaneseq
    %v149 = vshrl.u32 %v148, 7
    %v150 = vsub.s32 1, %v149
    %v151 = vrot.slane %v141, %v150
    %v154 = vpack.c.bf16 %v147, %v147
    %v155 = vpack.c.bf16 %v151, %v151
    %v252 = vunpack.c.l.b16 %v44
    %v253 = vunpack.c.h.b16 %v44
    %v254 = vunpack.c.l.b16 %v45
    %v255 = vunpack.c.h.b16 %v45
    %v256 = vunpack.c.l.b16 %v46
    %v257 = vunpack.c.h.b16 %v46
    %v258 = vunpack.c.l.b16 %v47
    %v259 = vunpack.c.h.b16 %v47
    %v260 = vunpack.c.l.b16 %v48
    %v261 = vunpack.c.h.b16 %v48
    %v262 = vunpack.c.l.b16 %v49
    %v263 = vunpack.c.h.b16 %v49
    %v264 = vunpack.c.l.b16 %v50
    %v265 = vunpack.c.h.b16 %v50
    %v266 = vunpack.c.l.b16 %v51
    %v267 = vunpack.c.h.b16 %v51
    %v268 = vunpack.c.l.b16 %v52
    %v269 = vunpack.c.h.b16 %v52
    %v270 = vunpack.c.l.b16 %v53
    %v271 = vunpack.c.h.b16 %v53
    %v272 = vunpack.c.l.b16 %v54
    %v273 = vunpack.c.h.b16 %v54
    %v274 = vunpack.c.l.b16 %v55
    %v275 = vunpack.c.h.b16 %v55
    %v276 = vunpack.c.l.b16 %v56
    %v277 = vunpack.c.h.b16 %v56
    %v278 = vunpack.c.l.b16 %v57
    %v279 = vunpack.c.h.b16 %v57
    %v280 = vunpack.c.l.b16 %v58
    %v281 = vunpack.c.h.b16 %v58
    %v282 = vunpack.c.l.b16 %v59
    %v283 = vunpack.c.h.b16 %v59
    %v284 = vunpack.c.l.b16 %v60
    %v285 = vunpack.c.h.b16 %v60
    %v286 = vunpack.c.l.b16 %v61
    %v287 = vunpack.c.h.b16 %v61
    %v288 = vunpack.c.l.b16 %v62
    %v289 = vunpack.c.h.b16 %v62
    %v290 = vunpack.c.l.b16 %v63
    %v291 = vunpack.c.h.b16 %v63
    %v292 = vunpack.c.l.b16 %v64
    %v293 = vunpack.c.h.b16 %v64
    %v294 = vunpack.c.l.b16 %v65
    %v295 = vunpack.c.h.b16 %v65
    %v296 = vunpack.c.l.b16 %v66
    %v297 = vunpack.c.h.b16 %v66
    %v298 = vunpack.c.l.b16 %v67
    %v299 = vunpack.c.h.b16 %v67
    %v300 = vunpack.c.l.b16 %v68
    %v301 = vunpack.c.h.b16 %v68
    %v302 = vunpack.c.l.b16 %v69
    %v303 = vunpack.c.h.b16 %v69
    %v304 = vunpack.c.l.b16 %v70
    %v305 = vunpack.c.h.b16 %v70
    %v306 = vunpack.c.l.b16 %v71
    %v307 = vunpack.c.h.b16 %v71
    %v308 = vunpack.c.l.b16 %v72
    %v309 = vunpack.c.h.b16 %v72
    %v310 = vunpack.c.l.b16 %v73
    %v311 = vunpack.c.h.b16 %v73
    %v312 = vunpack.c.l.b16 %v74
    %v313 = vunpack.c.h.b16 %v74
    %v314 = vunpack.c.l.b16 %v75
    %v315 = vunpack.c.h.b16 %v75
    %v316 = vunpack.c.l.b16 %v76
    %v317 = vunpack.c.h.b16 %v76
    %v318 = vunpack.c.l.b16 %v77
    %v319 = vunpack.c.h.b16 %v77
    %v320 = vunpack.c.l.b16 %v78
    %v321 = vunpack.c.h.b16 %v78
    %v322 = vunpack.c.l.b16 %v79
    %v323 = vunpack.c.h.b16 %v79
    %v324 = vunpack.c.l.b16 %v80
    %v325 = vunpack.c.h.b16 %v80
    %v326 = vunpack.c.l.b16 %v81
    %v327 = vunpack.c.h.b16 %v81
    %v328 = vunpack.c.l.b16 %v82
    %v329 = vunpack.c.h.b16 %v82
    %v330 = vunpack.c.l.b16 %v83
    %v331 = vunpack.c.h.b16 %v83
    %v332 = vunpack.c.l.b16 %v84
    %v333 = vunpack.c.h.b16 %v84
    %v334 = vunpack.c.l.b16 %v85
    %v335 = vunpack.c.h.b16 %v85
    %v336 = vunpack.c.l.b16 %v86
    %v337 = vunpack.c.h.b16 %v86
    %v338 = vunpack.c.l.b16 %v87
    %v339 = vunpack.c.h.b16 %v87
    %v340 = vunpack.c.l.b16 %v88
    %v341 = vunpack.c.h.b16 %v88
    %v342 = vunpack.c.l.b16 %v89
    %v343 = vunpack.c.h.b16 %v89
    %v344 = vunpack.c.l.b16 %v90
    %v345 = vunpack.c.h.b16 %v90
    %v346 = vunpack.c.l.b16 %v91
    %v347 = vunpack.c.h.b16 %v91
    %v348 = vunpack.c.l.b16 %v92
    %v349 = vunpack.c.h.b16 %v92
    %v350 = vunpack.c.l.b16 %v93
    %v351 = vunpack.c.h.b16 %v93
    %v352 = vunpack.c.l.b16 %v94
    %v353 = vunpack.c.h.b16 %v94
    %v354 = vunpack.c.l.b16 %v95
    %v355 = vunpack.c.h.b16 %v95
    %v356 = vunpack.c.l.b16 %v96
    %v357 = vunpack.c.h.b16 %v96
    %v358 = vunpack.c.l.b16 %v97
    %v359 = vunpack.c.h.b16 %v97
    %v360 = vunpack.c.l.b16 %v98
    %v361 = vunpack.c.h.b16 %v98
    %v362 = vunpack.c.l.b16 %v99
    %v363 = vunpack.c.h.b16 %v99
    %v364 = vunpack.c.l.b16 %v100
    %v365 = vunpack.c.h.b16 %v100
    %v366 = vunpack.c.l.b16 %v101
    %v367 = vunpack.c.h.b16 %v101
    %v368 = vunpack.c.l.b16 %v102
    %v369 = vunpack.c.h.b16 %v102
    %v370 = vunpack.c.l.b16 %v103
    %v371 = vunpack.c.h.b16 %v103
    %v372 = vunpack.c.l.b16 %v104
    %v373 = vunpack.c.h.b16 %v104
    %v374 = vunpack.c.l.b16 %v105
    %v375 = vunpack.c.h.b16 %v105
    %v376 = vunpack.c.l.b16 %v106
    %v377 = vunpack.c.h.b16 %v106
    %v378 = vunpack.c.l.b16 %v107
    %v379 = vunpack.c.h.b16 %v107
    %v380 = vunpack.c.l.b16 %v108
    %v381 = vunpack.c.h.b16 %v108
    %v382 = vunpack.c.l.b16 %v109
    %v383 = vunpack.c.h.b16 %v109
    %v384 = vunpack.c.l.b16 %v110
    %v385 = vunpack.c.h.b16 %v110
    %v386 = vunpack.c.l.b16 %v111
    %v387 = vunpack.c.h.b16 %v111
    %v388 = vunpack.c.l.b16 %v112
    %v389 = vunpack.c.h.b16 %v112
    %v390 = vunpack.c.l.b16 %v113
    %v391 = vunpack.c.h.b16 %v113
    %v392 = vunpack.c.l.b16 %v114
    %v393 = vunpack.c.h.b16 %v114
    %v394 = vunpack.c.l.b16 %v115
    %v395 = vunpack.c.h.b16 %v115
    %v396 = vunpack.c.l.b16 %v116
    %v397 = vunpack.c.h.b16 %v116
    %v398 = vunpack.c.l.b16 %v117
    %v399 = vunpack.c.h.b16 %v117
    %v400 = vunpack.c.l.b16 %v118
    %v401 = vunpack.c.h.b16 %v118
    %v402 = vunpack.c.l.b16 %v119
    %v403 = vunpack.c.h.b16 %v119
    %v404 = vunpack.c.l.b16 %v120
    %v405 = vunpack.c.h.b16 %v120
    %v406 = vunpack.c.l.b16 %v121
    %v407 = vunpack.c.h.b16 %v121
    %v408 = vunpack.c.l.b16 %v122
    %v409 = vunpack.c.h.b16 %v122
    %v410 = vunpack.c.l.b16 %v123
    %v411 = vunpack.c.h.b16 %v123
    %v412 = vunpack.c.l.b16 %v124
    %v413 = vunpack.c.h.b16 %v124
    %v414 = vunpack.c.l.b16 %v125
    %v415 = vunpack.c.h.b16 %v125
    %v416 = vunpack.c.l.b16 %v126
    %v417 = vunpack.c.h.b16 %v126
    %v418 = vunpack.c.l.b16 %v127
    %v419 = vunpack.c.h.b16 %v127
    %v420 = vunpack.c.l.b16 %v128
    %v421 = vunpack.c.h.b16 %v128
    %v422 = vunpack.c.l.b16 %v129
    %v423 = vunpack.c.h.b16 %v129
    %v424 = vunpack.c.l.b16 %v130
    %v425 = vunpack.c.h.b16 %v130
    %v426 = vunpack.c.l.b16 %v131
    %v427 = vunpack.c.h.b16 %v131
    %v428 = vunpack.c.l.b16 %v132
    %v429 = vunpack.c.h.b16 %v132
    %v430 = vunpack.c.l.b16 %v133
    %v431 = vunpack.c.h.b16 %v133
    %v432 = vunpack.c.l.b16 %v134
    %v433 = vunpack.c.h.b16 %v134
    %v434 = vunpack.c.l.b16 %v135
    %v435 = vunpack.c.h.b16 %v135
    %v436 = vunpack.c.l.b16 %v136
    %v437 = vunpack.c.h.b16 %v136
    %v438 = vunpack.c.l.b16 %v137
    %v439 = vunpack.c.h.b16 %v137
    %v440 = vunpack.c.l.b16 %v138
    %v441 = vunpack.c.h.b16 %v138
    %v442 = vunpack.c.l.b16 %v139
    %v443 = vunpack.c.h.b16 %v139
    %v444 = vpack.c.b16 %v258, %v252
    %v445 = vpack.c.b16 %v259, %v253
    %v446 = vpack.c.b16 %v260, %v254
    %v447 = vpack.c.b16 %v261, %v255
    %v448 = vpack.c.b16 %v262, %v256
    %v449 = vpack.c.b16 %v263, %v257
    %v450 = vpack.c.b16 %v270, %v264
    %v451 = vpack.c.b16 %v271, %v265
    %v452 = vpack.c.b16 %v272, %v266
    %v453 = vpack.c.b16 %v273, %v267
    %v454 = vpack.c.b16 %v274, %v268
    %v455 = vpack.c.b16 %v275, %v269
    %v456 = vpack.c.b16 %v282, %v276
    %v457 = vpack.c.b16 %v283, %v277
    %v458 = vpack.c.b16 %v284, %v278
    %v459 = vpack.c.b16 %v285, %v279
    %v460 = vpack.c.b16 %v286, %v280
    %v461 = vpack.c.b16 %v287, %v281
    %v462 = vpack.c.b16 %v294, %v288
    %v463 = vpack.c.b16 %v295, %v289
    %v464 = vpack.c.b16 %v296, %v290
    %v465 = vpack.c.b16 %v297, %v291
    %v466 = vpack.c.b16 %v298, %v292
    %v467 = vpack.c.b16 %v299, %v293
    %v468 = vpack.c.b16 %v306, %v300
    %v469 = vpack.c.b16 %v307, %v301
    %v470 = vpack.c.b16 %v308, %v302
    %v471 = vpack.c.b16 %v309, %v303
    %v472 = vpack.c.b16 %v310, %v304
    %v473 = vpack.c.b16 %v311, %v305
    %v474 = vpack.c.b16 %v318, %v312
    %v475 = vpack.c.b16 %v319, %v313
    %v476 = vpack.c.b16 %v320, %v314
    %v477 = vpack.c.b16 %v321, %v315
    %v478 = vpack.c.b16 %v322, %v316
    %v479 = vpack.c.b16 %v323, %v317
    %v480 = vpack.c.b16 %v330, %v324
    %v481 = vpack.c.b16 %v331, %v325
    %v482 = vpack.c.b16 %v332, %v326
    %v483 = vpack.c.b16 %v333, %v327
    %v484 = vpack.c.b16 %v334, %v328
    %v485 = vpack.c.b16 %v335, %v329
    %v486 = vpack.c.b16 %v342, %v336
    %v487 = vpack.c.b16 %v343, %v337
    %v488 = vpack.c.b16 %v344, %v338
    %v489 = vpack.c.b16 %v345, %v339
    %v490 = vpack.c.b16 %v346, %v340
    %v491 = vpack.c.b16 %v347, %v341
    %v492 = vpack.c.b16 %v354, %v348
    %v493 = vpack.c.b16 %v355, %v349
    %v494 = vpack.c.b16 %v356, %v350
    %v495 = vpack.c.b16 %v357, %v351
    %v496 = vpack.c.b16 %v358, %v352
    %v497 = vpack.c.b16 %v359, %v353
    %v498 = vpack.c.b16 %v366, %v360
    %v499 = vpack.c.b16 %v367, %v361
    %v500 = vpack.c.b16 %v368, %v362
    %v501 = vpack.c.b16 %v369, %v363
    %v502 = vpack.c.b16 %v370, %v364
    %v503 = vpack.c.b16 %v371, %v365
    %v504 = vpack.c.b16 %v378, %v372
    %v505 = vpack.c.b16 %v379, %v373
    %v506 = vpack.c.b16 %v380, %v374
    %v507 = vpack.c.b16 %v381, %v375
    %v508 = vpack.c.b16 %v382, %v376
    %v509 = vpack.c.b16 %v383, %v377
    %v510 = vpack.c.b16 %v390, %v384
    %v511 = vpack.c.b16 %v391, %v385
    %v512 = vpack.c.b16 %v392, %v386
    %v513 = vpack.c.b16 %v393, %v387
    %v514 = vpack.c.b16 %v394, %v388
    %v515 = vpack.c.b16 %v395, %v389
    %v516 = vpack.c.b16 %v402, %v396
    %v517 = vpack.c.b16 %v403, %v397
    %v518 = vpack.c.b16 %v404, %v398
    %v519 = vpack.c.b16 %v405, %v399
    %v520 = vpack.c.b16 %v406, %v400
    %v521 = vpack.c.b16 %v407, %v401
    %v522 = vpack.c.b16 %v414, %v408
    %v523 = vpack.c.b16 %v415, %v409
    %v524 = vpack.c.b16 %v416, %v410
    %v525 = vpack.c.b16 %v417, %v411
    %v526 = vpack.c.b16 %v418, %v412
    %v527 = vpack.c.b16 %v419, %v413
    %v528 = vpack.c.b16 %v426, %v420
    %v529 = vpack.c.b16 %v427, %v421
    %v530 = vpack.c.b16 %v428, %v422
    %v531 = vpack.c.b16 %v429, %v423
    %v532 = vpack.c.b16 %v430, %v424
    %v533 = vpack.c.b16 %v431, %v425
    %v534 = vpack.c.b16 %v438, %v432
    %v535 = vpack.c.b16 %v439, %v433
    %v536 = vpack.c.b16 %v440, %v434
    %v537 = vpack.c.b16 %v441, %v435
    %v538 = vpack.c.b16 %v442, %v436
    %v539 = vpack.c.b16 %v443, %v437
    %636 = vmatprep.subr.bf16.mxu0 %v445
    %637 = vmatpush1.bf16.msra.mxu0 %v444
    %638 = vmatprep.subr.bf16.mxu0 %v451
    %639 = vmatpush1.bf16.msra.mxu0 %v450
    %640 = vmatprep.subr.bf16.mxu0 %v457
    %641 = vmatpush1.bf16.msra.mxu0 %v456
    %642 = vmatprep.subr.bf16.mxu0 %v463
    %643 = vmatpush1.bf16.msra.mxu0 %v462
    %644 = vmatprep.subr.bf16.mxu0 %v469
    %645 = vmatpush1.bf16.msra.mxu0 %v468
    %646 = vmatprep.subr.bf16.mxu0 %v475
    %647 = vmatpush1.bf16.msra.mxu0 %v474
    %648 = vmatprep.subr.bf16.mxu0 %v481
    %649 = vmatpush1.bf16.msra.mxu0 %v480
    %650 = vmatprep.subr.bf16.mxu0 %v487
    %651 = vmatpush1.bf16.msra.mxu0 %v486
    %652 = vmatprep.subr.bf16.mxu0 %v493
    %653 = vmatpush1.bf16.msra.mxu0 %v492
    %654 = vmatprep.subr.bf16.mxu0 %v499
    %655 = vmatpush1.bf16.msra.mxu0 %v498
    %656 = vmatprep.subr.bf16.mxu0 %v505
    %657 = vmatpush1.bf16.msra.mxu0 %v504
    %658 = vmatprep.subr.bf16.mxu0 %v511
    %659 = vmatpush1.bf16.msra.mxu0 %v510
    %660 = vmatprep.subr.bf16.mxu0 %v517
    %661 = vmatpush1.bf16.msra.mxu0 %v516
    %662 = vmatprep.subr.bf16.mxu0 %v523
    %663 = vmatpush1.bf16.msra.mxu0 %v522
    %664 = vmatprep.subr.bf16.mxu0 %v529
    %665 = vmatpush1.bf16.msra.mxu0 %v528
    %666 = vmatprep.subr.bf16.mxu0 %v535
    %667 = vmatpush1.bf16.msra.mxu0 %v534
    %668 = vmatprep.mubr.bf16.mxu0 %v155
    %669 = vmatmul.mubr.bf16.gmra.mrb[0].mxu0 %v154
    %v670 = vpop.f32.mrb[0].mxu0
    %v671 = vadd.f32 0.0, %v670
    %v672 = vpop.f32.mrb[0].mxu0
    %v673 = vadd.f32 0.0, %v672
    %v674 = vpop.f32.mrb[0].mxu0
    %v675 = vpop.f32.mrb[0].mxu0
    %676 = vdwg.mxu0
    %677 = vmatprep.subr.bf16.mxu0 %v447
    %678 = vmatpush1.bf16.msra.mxu0 %v446
    %679 = vmatprep.subr.bf16.mxu0 %v453
    %680 = vmatpush1.bf16.msra.mxu0 %v452
    %681 = vmatprep.subr.bf16.mxu0 %v459
    %682 = vmatpush1.bf16.msra.mxu0 %v458
    %683 = vmatprep.subr.bf16.mxu0 %v465
    %684 = vmatpush1.bf16.msra.mxu0 %v464
    %685 = vmatprep.subr.bf16.mxu0 %v471
    %686 = vmatpush1.bf16.msra.mxu0 %v470
    %687 = vmatprep.subr.bf16.mxu0 %v477
    %688 = vmatpush1.bf16.msra.mxu0 %v476
    %689 = vmatprep.subr.bf16.mxu0 %v483
    %690 = vmatpush1.bf16.msra.mxu0 %v482
    %691 = vmatprep.subr.bf16.mxu0 %v489
    %692 = vmatpush1.bf16.msra.mxu0 %v488
    %693 = vmatprep.subr.bf16.mxu0 %v495
    %694 = vmatpush1.bf16.msra.mxu0 %v494
    %695 = vmatprep.subr.bf16.mxu0 %v501
    %696 = vmatpush1.bf16.msra.mxu0 %v500
    %697 = vmatprep.subr.bf16.mxu0 %v507
    %698 = vmatpush1.bf16.msra.mxu0 %v506
    %699 = vmatprep.subr.bf16.mxu0 %v513
    %700 = vmatpush1.bf16.msra.mxu0 %v512
    %701 = vmatprep.subr.bf16.mxu0 %v519
    %702 = vmatpush1.bf16.msra.mxu0 %v518
    %703 = vmatprep.subr.bf16.mxu0 %v525
    %704 = vmatpush1.bf16.msra.mxu0 %v524
    %705 = vmatprep.subr.bf16.mxu0 %v531
    %706 = vmatpush1.bf16.msra.mxu0 %v530
    %707 = vmatprep.subr.bf16.mxu0 %v537
    %708 = vmatpush1.bf16.msra.mxu0 %v536
    %709 = vmatprep.mubr.bf16.mxu0 %v155
    %710 = vmatmul.mubr.bf16.gmra.mrb[0].mxu0 %v154
    %v711 = vpop.f32.mrb[0].mxu0
    %v712 = vadd.f32 0.0, %v711
    %v713 = vpop.f32.mrb[0].mxu0
    %v714 = vadd.f32 0.0, %v713
    %v715 = vpop.f32.mrb[0].mxu0
    %v716 = vpop.f32.mrb[0].mxu0
    %717 = vdwg.mxu0
    %718 = vmatprep.subr.bf16.mxu0 %v449
    %719 = vmatpush1.bf16.msra.mxu0 %v448
    %720 = vmatprep.subr.bf16.mxu0 %v455
    %721 = vmatpush1.bf16.msra.mxu0 %v454
    %722 = vmatprep.subr.bf16.mxu0 %v461
    %723 = vmatpush1.bf16.msra.mxu0 %v460
    %724 = vmatprep.subr.bf16.mxu0 %v467
    %725 = vmatpush1.bf16.msra.mxu0 %v466
    %726 = vmatprep.subr.bf16.mxu0 %v473
    %727 = vmatpush1.bf16.msra.mxu0 %v472
    %728 = vmatprep.subr.bf16.mxu0 %v479
    %729 = vmatpush1.bf16.msra.mxu0 %v478
    %730 = vmatprep.subr.bf16.mxu0 %v485
    %731 = vmatpush1.bf16.msra.mxu0 %v484
    %732 = vmatprep.subr.bf16.mxu0 %v491
    %733 = vmatpush1.bf16.msra.mxu0 %v490
    %734 = vmatprep.subr.bf16.mxu0 %v497
    %735 = vmatpush1.bf16.msra.mxu0 %v496
    %736 = vmatprep.subr.bf16.mxu0 %v503
    %737 = vmatpush1.bf16.msra.mxu0 %v502
    %738 = vmatprep.subr.bf16.mxu0 %v509
    %739 = vmatpush1.bf16.msra.mxu0 %v508
    %740 = vmatprep.subr.bf16.mxu0 %v515
    %741 = vmatpush1.bf16.msra.mxu0 %v514
    %742 = vmatprep.subr.bf16.mxu0 %v521
    %743 = vmatpush1.bf16.msra.mxu0 %v520
    %744 = vmatprep.subr.bf16.mxu0 %v527
    %745 = vmatpush1.bf16.msra.mxu0 %v526
    %746 = vmatprep.subr.bf16.mxu0 %v533
    %747 = vmatpush1.bf16.msra.mxu0 %v532
    %748 = vmatprep.subr.bf16.mxu0 %v539
    %749 = vmatpush1.bf16.msra.mxu0 %v538
    %750 = vmatprep.mubr.bf16.mxu0 %v155
    %751 = vmatmul.mubr.bf16.gmra.mrb[0].mxu0 %v154
    %v752 = vpop.f32.mrb[0].mxu0
    %v753 = vadd.f32 0.0, %v752
    %v754 = vpop.f32.mrb[0].mxu0
    %v755 = vadd.f32 0.0, %v754
    %v756 = vpop.f32.mrb[0].mxu0
    %v757 = vpop.f32.mrb[0].mxu0
    %758 = vdwg.mxu0
    %v761 = vcombine.low %v671, %v673
    %v763 = vunpack.c.l.s4 1966171168
    %v764 = vunpack.c.0.s8 %v763
    %v765 = vlaneseq
    %v766 = vshrl.u32 %v765, 7
    %v767 = vsub.s32 %v764, %v766
    %v768 = vrot.slane %v761, %v767
    %v770 = vunpack.c.l.s4 1966171168
    %v771 = vunpack.c.0.s8 %v770
    %v772 = vlaneseq
    %v773 = vshrl.u32 %v772, 7
    %v774 = vsub.s32 %v771, %v773
    %v775 = vrot.slane %v768, %v774
    %v777 = vadd.f32 %v142, %v775
    %v778 = vxor.u32 %v777, 2147483648
    %v779 = vmul.f32 %v778, 1.442695
    %v780 = vpow.pop %v779
    %v781 = vadd.f32 %v780, 1.0
    %v782 = vrcp.pop %v781
    %v783 = vmul.f32 1.0, %v782
    %v785 = vrot.slane %v142, 2
    %v789 = vcombine.low %v712, %v714
    %v791 = vunpack.c.l.s4 1966171168
    %v792 = vunpack.c.0.s8 %v791
    %v793 = vlaneseq
    %v794 = vshrl.u32 %v793, 7
    %v795 = vsub.s32 %v792, %v794
    %v796 = vrot.slane %v789, %v795
    %v798 = vunpack.c.l.s4 1966171168
    %v799 = vunpack.c.0.s8 %v798
    %v800 = vlaneseq
    %v801 = vshrl.u32 %v800, 7
    %v802 = vsub.s32 %v799, %v801
    %v803 = vrot.slane %v796, %v802
    %v805 = vadd.f32 %v785, %v803
    %v806 = vxor.u32 %v805, 2147483648
    %v807 = vmul.f32 %v806, 1.442695
    %v808 = vpow.pop %v807
    %v809 = vadd.f32 %v808, 1.0
    %v810 = vrcp.pop %v809
    %v811 = vmul.f32 1.0, %v810
    %v813 = vlaneseq
    %v814 = vshrl.u32 %v813, 7
    %v815 = vsub.s32 0, %v814
    %v816 = vrot.slane %v140, %v815
    %v817 = vlaneseq
    %v818 = vshrl.u32 %v817, 7
    %v819 = vsub.s32 1, %v818
    %v820 = vrot.slane %v140, %v819
    %v823 = vadd.f32 %v753, %v816
    %v824 = vadd.f32 %v755, %v820
    %v827 = vcombine.low %v823, %v824
    %v829 = vunpack.c.l.s4 1966171168
    %v830 = vunpack.c.0.s8 %v829
    %v831 = vlaneseq
    %v832 = vshrl.u32 %v831, 7
    %v833 = vsub.s32 %v830, %v832
    %v834 = vrot.slane %v827, %v833
    %v836 = vunpack.c.l.s4 1966171168
    %v837 = vunpack.c.0.s8 %v836
    %v838 = vlaneseq
    %v839 = vshrl.u32 %v838, 7
    %v840 = vsub.s32 %v837, %v839
    %v841 = vrot.slane %v834, %v840
    %v843 = vmul.f32 %v783, %v841
    %v844 = vrot.slane %v142, 4
    %v846 = vadd.f32 %v844, %v843
    %v847 = vtanh.pop %v846
    %v848 = vsub.f32 1.0, %v811
    %v849 = vmul.f32 %v848, %v847
    %v850 = vmul.f32 %v811, %v141
    %v851 = vadd.f32 %v849, %v850
    %v852 = vlaneseq
    %vm853 = vcmp.ge.s32.totalorder %v852, 0
    %vm854 = vcmp.lt.s32.totalorder %v852, 256
    %vm855 = vmand %vm853, %vm854
    %856 = vst.msk [vmem:[#allocation7] sm:$0x3] %vm855, %v851
    // Predicated region
    $region26: #{tpu_custom_call.1} parent=1 // pred_check
      _
    $region27: #{tpu_custom_call.1} parent=1 // pred_check_branch
      %858 = sbr.rel (0) target = $region29
    $region28: #{tpu_custom_call.1} parent=1 // pred_region
      %s860 = ssub.s32 32, 32
      %861 = vsyncadd [#allocation4], %s860
      %s863 = sshll.u32 [#allocation7], 4
      %s864 = int_to_ptr.vmem [resolvable:$true] %s863
      %866 = dma.vmem_to_hbm [thread:$0]  %s864, 32, %s4, [#allocation4]
    $region29: #{tpu_custom_call.1} parent=1 // pred_fallthru
      _
    // Predicated region
    $region30: #{tpu_custom_call.1} parent=1 // pred_check
      _
    $region31: #{tpu_custom_call.1} parent=1 // pred_check_branch
      %868 = sbr.rel (0) target = $region33
    $region32: #{tpu_custom_call.1} parent=1 // pred_region
      %869 = dma.done [#allocation4], 32
    $region33: #{tpu_custom_call.1} parent=1 // pred_fallthru
      _
    %870 = vsyncpa [#allocation3], 1
    %871 = vsyncpa [#allocation6], 1
    %872 = vsyncpa [#allocation4], 1

</llo_original>
